<compile_context>
chip_gen: v6e
topology: v6e:2x2x1
jax: 0.10.0
libtpu: 0.0.40
codegen_flags: <defaults>
</compile_context>

<pallas_src>
import jax
import jax.numpy as jnp
from jax.experimental import pallas as pl
from jax.experimental.pallas import tpu as pltpu


INPUT_DIM = 350
INPUT_DIM_PAD = 384     # 3*128: unmasked lanes / clean MXU K-tiles
HIDDEN = 256
OUT_PAD = 128           # lane-dense layer-3 output (action_dim <= 128, zero-padded)

# Packed-weight row offsets (all multiples of the bf16 sublane tile -> free static slices).
_W1_END = INPUT_DIM_PAD              # rows   0 .. 384 : w1 (feature dim zero-padded)
_W2_END = _W1_END + HIDDEN           # rows 384 .. 640 : w2
_W3_END = _W2_END + HIDDEN           # rows 640 .. 896 : w3 (columns zero-padded to 256)


def _cdiv(a, b):
    return (a + b - 1) // b


def _round_up(a, m):
    return _cdiv(a, m) * m


def dqn_kernel(x_ref, w_ref, b_ref, o_ref):
    """One batch tile of the DQN MLP.

    x_ref: (TB, 384) bf16   input tile (feature dim zero-padded 350 -> 384)
    w_ref: (896, 256) bf16  packed [w1; w2; w3] (VMEM-resident across the grid)
    b_ref: (3, 256) f32     packed [b1; b2; b3] (b3 zero-padded)
    o_ref: (TB, 128) f32    layer-3 output, lane-dense
    """
    x = x_ref[...]

    # Layer 1: Linear(350 -> 256) + ReLU.  bf16 operands, f32 accumulation.
    h1 = jnp.dot(x, w_ref[0:_W1_END, :], preferred_element_type=jnp.float32)
    h1 = jnp.maximum(h1 + b_ref[0:1, :], 0.0)
    # TODO(synk): Dropout(p=0.2) is identity in eval mode; train-mode PRNG mask
    # (pltpu.prng_random_bits) intentionally not implemented.

    # Layer 2: Linear(256 -> 256) + ReLU.
    h2 = jnp.dot(h1.astype(jnp.bfloat16), w_ref[_W1_END:_W2_END, :],
                 preferred_element_type=jnp.float32)
    h2 = jnp.maximum(h2 + b_ref[1:2, :], 0.0)

    # Layer 3: Linear(256 -> action_dim), output padded to 128 lanes so the
    # store is an unmasked, lane-dense vst.
    out = jnp.dot(h2.astype(jnp.bfloat16), w_ref[_W2_END:_W3_END, 0:OUT_PAD],
                  preferred_element_type=jnp.float32)
    o_ref[...] = (out + b_ref[2:3, 0:OUT_PAD]).astype(o_ref.dtype)


def prepare_params(params):
    """One-time weight packing/casting (hoists all weight pad/cast out of forward).

    Returns (W, b, action_dim):
      W: (896, 256) bf16 packed [w1 padded to 384 rows; w2; w3 padded to 256 cols]
      b: (3, 256) f32 packed [b1; b2; b3 zero-padded]
    """
    w1, w2, w3 = params["w1"], params["w2"], params["w3"]
    action_dim = w3.shape[1]
    assert w1.shape == (INPUT_DIM, HIDDEN) and w2.shape == (HIDDEN, HIDDEN)
    assert w3.shape[0] == HIDDEN and action_dim <= OUT_PAD

    w1p = jnp.pad(w1, ((0, INPUT_DIM_PAD - INPUT_DIM), (0, 0)))
    w3p = jnp.pad(w3, ((0, 0), (0, HIDDEN - action_dim)))
    W = jnp.concatenate([w1p, w2, w3p], axis=0).astype(jnp.bfloat16)

    def _bias(bv):
        bv = jnp.asarray(bv, jnp.float32).reshape(1, -1)
        return jnp.pad(bv, ((0, 0), (0, HIDDEN - bv.shape[1])))

    b = jnp.concatenate([_bias(params["b1"]), _bias(params["b2"]),
                         _bias(params["b3"])], axis=0)
    return W, b, action_dim


def dqn_forward(x, W, b, *, action_dim, block_b=1024):
    """DQN forward (eval mode).  x: (B, 350) f32; (W, b) from prepare_params."""
    B, K = x.shape
    assert K == INPUT_DIM, K
    assert W.shape == (_W3_END, HIDDEN) and b.shape == (3, HIDDEN)

    # Only per-call prep: zero-pad the feature dim to 384 and cast to bf16
    # (one small fused XLA op; weights were padded/cast once in prepare_params).
    x_p = jnp.pad(x, ((0, 0), (0, INPUT_DIM_PAD - K))).astype(jnp.bfloat16)

    # Batch tiling: single VMEM-resident block for small B; otherwise an even
    # number of ~equal, sublane-aligned tiles (balanced across v7x's 2 TCs).
    # The ragged last tile is handled by Pallas (no explicit batch pad/slice).
    if B <= block_b:
        tb, n_tiles = B, 1
    else:
        n_tiles = _cdiv(B, block_b)
        if n_tiles % 2:
            n_tiles += 1
        tb = _round_up(_cdiv(B, n_tiles), 16)
        n_tiles = _cdiv(B, tb)

    out = pl.pallas_call(
        dqn_kernel,
        out_shape=jax.ShapeDtypeStruct((B, OUT_PAD), jnp.float32),
        grid=(n_tiles,),
        in_specs=[
            pl.BlockSpec((tb, INPUT_DIM_PAD), lambda i: (i, 0)),
            # Constant index_map -> weights/biases DMA'd once, VMEM-resident.
            pl.BlockSpec(W.shape, lambda i: (0, 0)),
            pl.BlockSpec(b.shape, lambda i: (0, 0)),
        ],
        out_specs=pl.BlockSpec((tb, OUT_PAD), lambda i: (i, 0)),
        compiler_params=pltpu.CompilerParams(
            dimension_semantics=("parallel",)),
    )(x_p, W, b)
    return out[:, :action_dim]


def init_params(key, input_dim=INPUT_DIM, hidden=HIDDEN, action_dim=6):
    """PyTorch nn.Linear default init (U[-1/sqrt(fan_in), 1/sqrt(fan_in)]).
    Weights stored as (in, out) so the kernel computes x @ W."""
    ks = jax.random.split(key, 6)

    def linear(kw, kb, fan_in, fan_out):
        bound = 1.0 / jnp.sqrt(fan_in)
        w = jax.random.uniform(kw, (fan_in, fan_out), jnp.float32, -bound, bound)
        bias = jax.random.uniform(kb, (1, fan_out), jnp.float32, -bound, bound)
        return w, bias

    w1, b1 = linear(ks[0], ks[1], input_dim, hidden)
    w2, b2 = linear(ks[2], ks[3], hidden, hidden)
    w3, b3 = linear(ks[4], ks[5], hidden, action_dim)
    return {"w1": w1, "b1": b1, "w2": w2, "b2": b2, "w3": w3, "b3": b3}


def dqn_reference_f32(x, p):
    """Pure-JAX f32 reference."""
    h1 = jnp.maximum(x @ p["w1"] + p["b1"], 0.0)
    h2 = jnp.maximum(h1 @ p["w2"] + p["b2"], 0.0)
    return h2 @ p["w3"] + p["b3"]


def dqn_reference_bf16(x, p):
    """Pure-JAX reference matching the kernel's bf16-operand / f32-acc numerics."""
    xb = x.astype(jnp.bfloat16)
    w1 = p["w1"].astype(jnp.bfloat16)
    w2 = p["w2"].astype(jnp.bfloat16)
    w3 = p["w3"].astype(jnp.bfloat16)
    h1 = jnp.maximum(
        jnp.dot(xb, w1, preferred_element_type=jnp.float32) + p["b1"], 0.0)
    h2 = jnp.maximum(
        jnp.dot(h1.astype(jnp.bfloat16), w2, preferred_element_type=jnp.float32)
        + p["b2"], 0.0)
    return (jnp.dot(h2.astype(jnp.bfloat16), w3, preferred_element_type=jnp.float32)
            + p["b3"])


if __name__ == "__main__":
    key = jax.random.PRNGKey(0)
    kx, kp, kx2 = jax.random.split(key, 3)

    ACTION_DIM = 6
    params = init_params(kp, action_dim=ACTION_DIM)
    W, b, a_dim = prepare_params(params)          # one-time weight prep (hoisted)

    fwd = jax.jit(dqn_forward, static_argnames=("action_dim", "block_b"))

    # --- Small batch: single VMEM-resident tile (typical DQN inference usage).
    B = 2
    x = jax.random.normal(kx, (B, INPUT_DIM), dtype=jnp.float32)
    out = jax.block_until_ready(fwd(x, W, b, action_dim=a_dim))
    assert out.shape == (B, ACTION_DIM), out.shape
    ref = dqn_reference_bf16(x, params)
    assert jnp.allclose(out, ref, atol=2e-2, rtol=2e-2), "mismatch vs bf16 reference"
    ref32 = dqn_reference_f32(x, params)
    assert jnp.allclose(out, ref32, atol=1e-1, rtol=1e-1), "mismatch vs f32 reference"

    # --- Gridded path: small block_b forces 4 balanced tiles with a ragged last
    # tile (exercises even-tile-count selection and OOB-masked writes).
    B2 = 300
    x2 = jax.random.normal(kx2, (B2, INPUT_DIM), dtype=jnp.float32)
    out2 = jax.block_until_ready(fwd(x2, W, b, action_dim=a_dim, block_b=128))
    assert out2.shape == (B2, ACTION_DIM), out2.shape
    ref2 = dqn_reference_bf16(x2, params)
    assert jnp.allclose(out2, ref2, atol=2e-2, rtol=2e-2), "batched mismatch"

    print("KERNEL_OK")
</pallas_src>

<mosaic_0001>
module attributes {stable_mosaic.version = 11 : i64} {
  func.func @dqn_kernel(%arg0: i32, %arg1: memref<2x384xbf16, #tpu.memory_space<vmem>>, %arg2: memref<896x256xbf16, #tpu.memory_space<vmem>>, %arg3: memref<3x256xf32, #tpu.memory_space<vmem>>, %arg4: memref<2x128xf32, #tpu.memory_space<vmem>>) attributes {dimension_semantics = [#tpu.dimension_semantics<parallel>], iteration_bounds = array<i64: 1>, scalar_prefetch = 0 : i64, scratch_operands = 0 : i64, tpu.core_type = #tpu.core_type<tc>, window_params = [{transform_indices = @transform_0, window_bounds = array<i64: 2, 384>}, {pipeline_mode = #tpu.pipeline_mode<synchronous>, transform_indices = @transform_1, window_bounds = array<i64: 896, 256>}, {pipeline_mode = #tpu.pipeline_mode<synchronous>, transform_indices = @transform_2, window_bounds = array<i64: 3, 256>}, {transform_indices = @transform_3, window_bounds = array<i64: 2, 128>}]} {
    %c0 = arith.constant 0 : index
    %c0_0 = arith.constant 0 : index
    %0 = vector.load %arg1[%c0, %c0_0] : memref<2x384xbf16, #tpu.memory_space<vmem>>, vector<2x384xbf16>
    %c0_1 = arith.constant 0 : index
    %c0_2 = arith.constant 0 : index
    %1 = vector.load %arg2[%c0_1, %c0_2] : memref<896x256xbf16, #tpu.memory_space<vmem>>, vector<384x256xbf16>
    %cst = arith.constant dense<0.000000e+00> : vector<2x256xf32>
    %2 = tpu.matmul %0, %1, %cst {dimension_numbers = #tpu.dot_dimension_numbers<[1], [0], [0], [1], [0, 0, 1, 1], [], []>} : vector<2x384xbf16>, vector<384x256xbf16>, vector<2x256xf32> -> vector<2x256xf32>
    %c0_3 = arith.constant 0 : index
    %c0_4 = arith.constant 0 : index
    %3 = vector.load %arg3[%c0_3, %c0_4] : memref<3x256xf32, #tpu.memory_space<vmem>>, vector<1x256xf32>
    %4 = vector.broadcast %3 : vector<1x256xf32> to vector<2x256xf32>
    %5 = arith.addf %2, %4 : vector<2x256xf32>
    %cst_5 = arith.constant 0.000000e+00 : f32
    %6 = vector.broadcast %cst_5 : f32 to vector<2x256xf32>
    %7 = arith.maximumf %5, %6 : vector<2x256xf32>
    %8 = arith.truncf %7 : vector<2x256xf32> to vector<2x256xbf16>
    %c384 = arith.constant 384 : index
    %c0_6 = arith.constant 0 : index
    %9 = vector.load %arg2[%c384, %c0_6] : memref<896x256xbf16, #tpu.memory_space<vmem>>, vector<256x256xbf16>
    %cst_7 = arith.constant dense<0.000000e+00> : vector<2x256xf32>
    %10 = tpu.matmul %8, %9, %cst_7 {dimension_numbers = #tpu.dot_dimension_numbers<[1], [0], [0], [1], [0, 0, 1, 1], [], []>} : vector<2x256xbf16>, vector<256x256xbf16>, vector<2x256xf32> -> vector<2x256xf32>
    %c1 = arith.constant 1 : index
    %c0_8 = arith.constant 0 : index
    %11 = vector.load %arg3[%c1, %c0_8] : memref<3x256xf32, #tpu.memory_space<vmem>>, vector<1x256xf32>
    %12 = vector.broadcast %11 : vector<1x256xf32> to vector<2x256xf32>
    %13 = arith.addf %10, %12 : vector<2x256xf32>
    %cst_9 = arith.constant 0.000000e+00 : f32
    %14 = vector.broadcast %cst_9 : f32 to vector<2x256xf32>
    %15 = arith.maximumf %13, %14 : vector<2x256xf32>
    %16 = arith.truncf %15 : vector<2x256xf32> to vector<2x256xbf16>
    %c640 = arith.constant 640 : index
    %c0_10 = arith.constant 0 : index
    %17 = vector.load %arg2[%c640, %c0_10] : memref<896x256xbf16, #tpu.memory_space<vmem>>, vector<256x128xbf16>
    %cst_11 = arith.constant dense<0.000000e+00> : vector<2x128xf32>
    %18 = tpu.matmul %16, %17, %cst_11 {dimension_numbers = #tpu.dot_dimension_numbers<[1], [0], [0], [1], [0, 0, 1, 1], [], []>} : vector<2x256xbf16>, vector<256x128xbf16>, vector<2x128xf32> -> vector<2x128xf32>
    %c2 = arith.constant 2 : index
    %c0_12 = arith.constant 0 : index
    %19 = vector.load %arg3[%c2, %c0_12] : memref<3x256xf32, #tpu.memory_space<vmem>>, vector<1x128xf32>
    %20 = vector.broadcast %19 : vector<1x128xf32> to vector<2x128xf32>
    %21 = arith.addf %18, %20 : vector<2x128xf32>
    %c0_13 = arith.constant 0 : index
    %c0_14 = arith.constant 0 : index
    %22 = vector.load %arg4[%c0_13, %c0_14] : memref<2x128xf32, #tpu.memory_space<vmem>>, vector<2x128xf32>
    tpu.vector_store %arg4[%c0_13, %c0_14], %21 {strides = array<i32>} : memref<2x128xf32, #tpu.memory_space<vmem>>, vector<2x128xf32>,
    return
  }
  func.func @transform_0(%arg0: i32) -> (i32, i32) {
    %c0_i32 = arith.constant 0 : i32
    %c0_i32_0 = arith.constant 0 : i32
    return %arg0, %c0_i32 : i32, i32
  }
  func.func @transform_1(%arg0: i32) -> (i32, i32) {
    %c0_i32 = arith.constant 0 : i32
    %c0_i32_0 = arith.constant 0 : i32
    %c0_i32_1 = arith.constant 0 : i32
    return %c0_i32, %c0_i32_0 : i32, i32
  }
  func.func @transform_2(%arg0: i32) -> (i32, i32) {
    %c0_i32 = arith.constant 0 : i32
    %c0_i32_0 = arith.constant 0 : i32
    %c0_i32_1 = arith.constant 0 : i32
    return %c0_i32, %c0_i32_0 : i32, i32
  }
  func.func @transform_3(%arg0: i32) -> (i32, i32) {
    %c0_i32 = arith.constant 0 : i32
    %c0_i32_0 = arith.constant 0 : i32
    return %arg0, %c0_i32 : i32, i32
  }
}

</mosaic_0001>

<llo_original>
// kernel: dqn_forward.1
$region0: #{dqn_forward.1}
  #allocation0 [shape = 'u32[]', space=smem, size = 0x4, offset = 0x4, fixed_abs, tag = 'smem constant byte address 0x4 - core index']
  #allocation1 [shape = 'u32[144,128]{1,0:T(1,128)}', space=vmem, size = 0x12000, scoped, tag = 'internal scratch']
  %s0 = inlined_call_operand.vmem [shape: bf16[2,384], index: 0, kind: input, shape index: {}]
  %s1 = inlined_call_operand.hbm [shape: bf16[896,256], index: 1, kind: input, shape index: {}]
  %s2 = inlined_call_operand.vmem [shape: f32[3,256], index: 2, kind: input, shape index: {}]
  %s3 = inlined_call_operand.hbm [shape: f32[2,128], index: 3, kind: output, shape index: {}]
  %s4 = sld [smem:[#allocation0]]
  $region26: #{dqn_forward.1} parent=0
    _
  %s6 = ssub.s32 1, %s4
  %s7 = scalar_select 0, %s6, %s4
  $region1: #{dqn_forward.1} parent=0
    #allocation2 [shape = 'u8[458752]{0}', space=vmem, size = 0x70000, scoped, tag = 'input window, operand 1, single buffered']
    #allocation3 [shape = 's32[1]{0}', space=sflag, size = 0x4, scoped, tag = 'scoped memory for dqn_forward.1']
    #allocation4 [shape = 's32[1]{0}', space=sflag, size = 0x4, scoped, tag = 'scoped memory for dqn_forward.1']
    #allocation5 [shape = 'u8[1024]{0}', space=vmem, size = 0x400, scoped, tag = 'output window, operand 0, single buffered']
    %8 = vsyncpa [#allocation3], 0
    %9 = vsyncpa [#allocation4], 0
    // Predicated region
    $region2: #{dqn_forward.1} parent=1 // pred_check
      _
    $region3: #{dqn_forward.1} parent=1 // pred_check_branch
      %11 = sbr.rel (0) target = $region5
    $region4: #{dqn_forward.1} parent=1 // pred_region
      _
    $region5: #{dqn_forward.1} parent=1 // pred_fallthru
      _
    // Predicated region
    $region6: #{dqn_forward.1} parent=1 // pred_check
      _
    $region7: #{dqn_forward.1} parent=1 // pred_check_branch
      %13 = sbr.rel (0) target = $region9
    $region8: #{dqn_forward.1} parent=1 // pred_region
      %s15 = ssub.s32 14336, 14336
      %16 = vsyncadd [#allocation3], %s15
      %s17 = sshll.u32 [#allocation2], 4
      %s18 = int_to_ptr.vmem [resolvable:$true] %s17
      %23 = dma.hbm_to_vmem [thread:$0]  %s1, 14336, %s18, [#allocation3], 128, 128, 8
    $region9: #{dqn_forward.1} parent=1 // pred_fallthru
      _
    // Predicated region
    $region10: #{dqn_forward.1} parent=1 // pred_check
      _
    $region11: #{dqn_forward.1} parent=1 // pred_check_branch
      %25 = sbr.rel (0) target = $region13
    $region12: #{dqn_forward.1} parent=1 // pred_region
      _
    $region13: #{dqn_forward.1} parent=1 // pred_fallthru
      _
    // Predicated region
    $region14: #{dqn_forward.1} parent=1 // pred_check
      _
    $region15: #{dqn_forward.1} parent=1 // pred_check_branch
      %27 = sbr.rel (0) target = $region17
    $region16: #{dqn_forward.1} parent=1 // pred_region
      %28 = dma.done [#allocation3], 14336
    $region17: #{dqn_forward.1} parent=1 // pred_fallthru
      _
    %v30 = vld [vmem:[%s0] sm:$0x7]
    %v31 = vld [vmem:[#allocation2] sm:$0xff]
    %v32 = vld [vmem:[#allocation2 + $0x8] sm:$0xff]
    %v33 = vld [vmem:[#allocation2 + $0x10] sm:$0xff]
    %v34 = vld [vmem:[#allocation2 + $0x18] sm:$0xff]
    %v35 = vld [vmem:[#allocation2 + $0x20] sm:$0xff]
    %v36 = vld [vmem:[#allocation2 + $0x28] sm:$0xff]
    %v37 = vld [vmem:[#allocation2 + $0x30] sm:$0xff]
    %v38 = vld [vmem:[#allocation2 + $0x38] sm:$0xff]
    %v39 = vld [vmem:[#allocation2 + $0x40] sm:$0xff]
    %v40 = vld [vmem:[#allocation2 + $0x48] sm:$0xff]
    %v41 = vld [vmem:[#allocation2 + $0x50] sm:$0xff]
    %v42 = vld [vmem:[#allocation2 + $0x58] sm:$0xff]
    %v43 = vld [vmem:[#allocation2 + $0x60] sm:$0xff]
    %v44 = vld [vmem:[#allocation2 + $0x68] sm:$0xff]
    %v45 = vld [vmem:[#allocation2 + $0x70] sm:$0xff]
    %v46 = vld [vmem:[#allocation2 + $0x78] sm:$0xff]
    %v47 = vld [vmem:[#allocation2 + $0x80] sm:$0xff]
    %v48 = vld [vmem:[#allocation2 + $0x88] sm:$0xff]
    %v49 = vld [vmem:[#allocation2 + $0x90] sm:$0xff]
    %v50 = vld [vmem:[#allocation2 + $0x98] sm:$0xff]
    %v51 = vld [vmem:[#allocation2 + $0xa0] sm:$0xff]
    %v52 = vld [vmem:[#allocation2 + $0xa8] sm:$0xff]
    %v53 = vld [vmem:[#allocation2 + $0xb0] sm:$0xff]
    %v54 = vld [vmem:[#allocation2 + $0xb8] sm:$0xff]
    %v55 = vld [vmem:[#allocation2 + $0xc0] sm:$0xff]
    %v56 = vld [vmem:[#allocation2 + $0xc8] sm:$0xff]
    %v57 = vld [vmem:[#allocation2 + $0xd0] sm:$0xff]
    %v58 = vld [vmem:[#allocation2 + $0xd8] sm:$0xff]
    %v59 = vld [vmem:[#allocation2 + $0xe0] sm:$0xff]
    %v60 = vld [vmem:[#allocation2 + $0xe8] sm:$0xff]
    %v61 = vld [vmem:[#allocation2 + $0xf0] sm:$0xff]
    %v62 = vld [vmem:[#allocation2 + $0xf8] sm:$0xff]
    %v63 = vld [vmem:[#allocation2 + $0x100] sm:$0xff]
    %v64 = vld [vmem:[#allocation2 + $0x108] sm:$0xff]
    %v65 = vld [vmem:[#allocation2 + $0x110] sm:$0xff]
    %v66 = vld [vmem:[#allocation2 + $0x118] sm:$0xff]
    %v67 = vld [vmem:[#allocation2 + $0x120] sm:$0xff]
    %v68 = vld [vmem:[#allocation2 + $0x128] sm:$0xff]
    %v69 = vld [vmem:[#allocation2 + $0x130] sm:$0xff]
    %v70 = vld [vmem:[#allocation2 + $0x138] sm:$0xff]
    %v71 = vld [vmem:[#allocation2 + $0x140] sm:$0xff]
    %v72 = vld [vmem:[#allocation2 + $0x148] sm:$0xff]
    %v73 = vld [vmem:[#allocation2 + $0x150] sm:$0xff]
    %v74 = vld [vmem:[#allocation2 + $0x158] sm:$0xff]
    %v75 = vld [vmem:[#allocation2 + $0x160] sm:$0xff]
    %v76 = vld [vmem:[#allocation2 + $0x168] sm:$0xff]
    %v77 = vld [vmem:[#allocation2 + $0x170] sm:$0xff]
    %v78 = vld [vmem:[#allocation2 + $0x178] sm:$0xff]
    %v79 = vld [vmem:[%s2] ss:$4 sm:$0x3]
    %v81 = vlaneseq
    %v82 = vshrl.u32 %v81, 7
    %v83 = vsub.s32 0, %v82
    %v84 = vrot.slane %v79, %v83
    %v85 = vlaneseq
    %v86 = vshrl.u32 %v85, 7
    %v87 = vsub.s32 1, %v86
    %v88 = vrot.slane %v79, %v87
    %v93 = vunpack.c.l.s4 1966171168
    %v94 = vunpack.c.0.s8 %v93
    %v95 = vlaneseq
    %v96 = vshrl.u32 %v95, 7
    %v97 = vsub.s32 %v94, %v96
    %v98 = vrot.slane %v30, %v97
    %v99 = vcombine.high %v98, %v98
    %v101 = vunpack.c.l.s4 1966171168
    %v102 = vunpack.c.0.s8 %v101
    %v103 = vlaneseq
    %v104 = vshrl.u32 %v103, 7
    %v105 = vsub.s32 %v102, %v104
    %v106 = vrot.slane %v98, %v105
    %v108 = vunpack.c.l.s4 1966171168
    %v109 = vunpack.c.0.s8 %v108
    %v110 = vlaneseq
    %v111 = vshrl.u32 %v110, 7
    %v112 = vsub.s32 %v109, %v111
    %v113 = vrot.slane %v99, %v112
    %v114 = vcombine.high %v106, %v106
    %v166 = vunpack.c.l.b16 %v31
    %v167 = vunpack.c.h.b16 %v31
    %v168 = vunpack.c.l.b16 %v32
    %v169 = vunpack.c.h.b16 %v32
    %v170 = vunpack.c.l.b16 %v33
    %v171 = vunpack.c.h.b16 %v33
    %v172 = vunpack.c.l.b16 %v34
    %v173 = vunpack.c.h.b16 %v34
    %v174 = vunpack.c.l.b16 %v35
    %v175 = vunpack.c.h.b16 %v35
    %v176 = vunpack.c.l.b16 %v36
    %v177 = vunpack.c.h.b16 %v36
    %v178 = vunpack.c.l.b16 %v37
    %v179 = vunpack.c.h.b16 %v37
    %v180 = vunpack.c.l.b16 %v38
    %v181 = vunpack.c.h.b16 %v38
    %v182 = vunpack.c.l.b16 %v39
    %v183 = vunpack.c.h.b16 %v39
    %v184 = vunpack.c.l.b16 %v40
    %v185 = vunpack.c.h.b16 %v40
    %v186 = vunpack.c.l.b16 %v41
    %v187 = vunpack.c.h.b16 %v41
    %v188 = vunpack.c.l.b16 %v42
    %v189 = vunpack.c.h.b16 %v42
    %v190 = vunpack.c.l.b16 %v43
    %v191 = vunpack.c.h.b16 %v43
    %v192 = vunpack.c.l.b16 %v44
    %v193 = vunpack.c.h.b16 %v44
    %v194 = vunpack.c.l.b16 %v45
    %v195 = vunpack.c.h.b16 %v45
    %v196 = vunpack.c.l.b16 %v46
    %v197 = vunpack.c.h.b16 %v46
    %v198 = vunpack.c.l.b16 %v47
    %v199 = vunpack.c.h.b16 %v47
    %v200 = vunpack.c.l.b16 %v48
    %v201 = vunpack.c.h.b16 %v48
    %v202 = vunpack.c.l.b16 %v49
    %v203 = vunpack.c.h.b16 %v49
    %v204 = vunpack.c.l.b16 %v50
    %v205 = vunpack.c.h.b16 %v50
    %v206 = vunpack.c.l.b16 %v51
    %v207 = vunpack.c.h.b16 %v51
    %v208 = vunpack.c.l.b16 %v52
    %v209 = vunpack.c.h.b16 %v52
    %v210 = vunpack.c.l.b16 %v53
    %v211 = vunpack.c.h.b16 %v53
    %v212 = vunpack.c.l.b16 %v54
    %v213 = vunpack.c.h.b16 %v54
    %v214 = vunpack.c.l.b16 %v55
    %v215 = vunpack.c.h.b16 %v55
    %v216 = vunpack.c.l.b16 %v56
    %v217 = vunpack.c.h.b16 %v56
    %v218 = vunpack.c.l.b16 %v57
    %v219 = vunpack.c.h.b16 %v57
    %v220 = vunpack.c.l.b16 %v58
    %v221 = vunpack.c.h.b16 %v58
    %v222 = vunpack.c.l.b16 %v59
    %v223 = vunpack.c.h.b16 %v59
    %v224 = vunpack.c.l.b16 %v60
    %v225 = vunpack.c.h.b16 %v60
    %v226 = vunpack.c.l.b16 %v61
    %v227 = vunpack.c.h.b16 %v61
    %v228 = vunpack.c.l.b16 %v62
    %v229 = vunpack.c.h.b16 %v62
    %v230 = vunpack.c.l.b16 %v63
    %v231 = vunpack.c.h.b16 %v63
    %v232 = vunpack.c.l.b16 %v64
    %v233 = vunpack.c.h.b16 %v64
    %v234 = vunpack.c.l.b16 %v65
    %v235 = vunpack.c.h.b16 %v65
    %v236 = vunpack.c.l.b16 %v66
    %v237 = vunpack.c.h.b16 %v66
    %v238 = vunpack.c.l.b16 %v67
    %v239 = vunpack.c.h.b16 %v67
    %v240 = vunpack.c.l.b16 %v68
    %v241 = vunpack.c.h.b16 %v68
    %v242 = vunpack.c.l.b16 %v69
    %v243 = vunpack.c.h.b16 %v69
    %v244 = vunpack.c.l.b16 %v70
    %v245 = vunpack.c.h.b16 %v70
    %v246 = vunpack.c.l.b16 %v71
    %v247 = vunpack.c.h.b16 %v71
    %v248 = vunpack.c.l.b16 %v72
    %v249 = vunpack.c.h.b16 %v72
    %v250 = vunpack.c.l.b16 %v73
    %v251 = vunpack.c.h.b16 %v73
    %v252 = vunpack.c.l.b16 %v74
    %v253 = vunpack.c.h.b16 %v74
    %v254 = vunpack.c.l.b16 %v75
    %v255 = vunpack.c.h.b16 %v75
    %v256 = vunpack.c.l.b16 %v76
    %v257 = vunpack.c.h.b16 %v76
    %v258 = vunpack.c.l.b16 %v77
    %v259 = vunpack.c.h.b16 %v77
    %v260 = vunpack.c.l.b16 %v78
    %v261 = vunpack.c.h.b16 %v78
    %v262 = vpack.c.b16 %v168, %v166
    %v263 = vpack.c.b16 %v169, %v167
    %v264 = vpack.c.b16 %v172, %v170
    %v265 = vpack.c.b16 %v173, %v171
    %v266 = vpack.c.b16 %v176, %v174
    %v267 = vpack.c.b16 %v177, %v175
    %v268 = vpack.c.b16 %v180, %v178
    %v269 = vpack.c.b16 %v181, %v179
    %v270 = vpack.c.b16 %v184, %v182
    %v271 = vpack.c.b16 %v185, %v183
    %v272 = vpack.c.b16 %v188, %v186
    %v273 = vpack.c.b16 %v189, %v187
    %v274 = vpack.c.b16 %v192, %v190
    %v275 = vpack.c.b16 %v193, %v191
    %v276 = vpack.c.b16 %v196, %v194
    %v277 = vpack.c.b16 %v197, %v195
    %v278 = vpack.c.b16 %v200, %v198
    %v279 = vpack.c.b16 %v201, %v199
    %v280 = vpack.c.b16 %v204, %v202
    %v281 = vpack.c.b16 %v205, %v203
    %v282 = vpack.c.b16 %v208, %v206
    %v283 = vpack.c.b16 %v209, %v207
    %v284 = vpack.c.b16 %v212, %v210
    %v285 = vpack.c.b16 %v213, %v211
    %v286 = vpack.c.b16 %v216, %v214
    %v287 = vpack.c.b16 %v217, %v215
    %v288 = vpack.c.b16 %v220, %v218
    %v289 = vpack.c.b16 %v221, %v219
    %v290 = vpack.c.b16 %v224, %v222
    %v291 = vpack.c.b16 %v225, %v223
    %v292 = vpack.c.b16 %v228, %v226
    %v293 = vpack.c.b16 %v229, %v227
    %v294 = vpack.c.b16 %v232, %v230
    %v295 = vpack.c.b16 %v233, %v231
    %v296 = vpack.c.b16 %v236, %v234
    %v297 = vpack.c.b16 %v237, %v235
    %v298 = vpack.c.b16 %v240, %v238
    %v299 = vpack.c.b16 %v241, %v239
    %v300 = vpack.c.b16 %v244, %v242
    %v301 = vpack.c.b16 %v245, %v243
    %v302 = vpack.c.b16 %v248, %v246
    %v303 = vpack.c.b16 %v249, %v247
    %v304 = vpack.c.b16 %v252, %v250
    %v305 = vpack.c.b16 %v253, %v251
    %v306 = vpack.c.b16 %v256, %v254
    %v307 = vpack.c.b16 %v257, %v255
    %v308 = vpack.c.b16 %v260, %v258
    %v309 = vpack.c.b16 %v261, %v259
    %358 = vmatprep.subr.bf16.mxu0 %v277
    %359 = vmatpush1.bf16.msra.mxu0 %v276
    %360 = vmatprep.subr.bf16.mxu0 %v275
    %361 = vmatpush1.bf16.msra.mxu0 %v274
    %362 = vmatprep.subr.bf16.mxu0 %v273
    %363 = vmatpush1.bf16.msra.mxu0 %v272
    %364 = vmatprep.subr.bf16.mxu0 %v271
    %365 = vmatpush1.bf16.msra.mxu0 %v270
    %366 = vmatprep.subr.bf16.mxu0 %v269
    %367 = vmatpush1.bf16.msra.mxu0 %v268
    %368 = vmatprep.subr.bf16.mxu0 %v267
    %369 = vmatpush1.bf16.msra.mxu0 %v266
    %370 = vmatprep.subr.bf16.mxu0 %v265
    %371 = vmatpush1.bf16.msra.mxu0 %v264
    %372 = vmatprep.subr.bf16.mxu0 %v263
    %373 = vmatpush1.bf16.msra.mxu0 %v262
    %374 = vmatprep.subr.bf16.mxu0 %v293
    %375 = vmatpush2.bf16.msra.mxu0 %v292
    %376 = vmatprep.subr.bf16.mxu0 %v291
    %377 = vmatpush2.bf16.msra.mxu0 %v290
    %378 = vmatprep.subr.bf16.mxu0 %v289
    %379 = vmatpush2.bf16.msra.mxu0 %v288
    %380 = vmatprep.subr.bf16.mxu0 %v287
    %381 = vmatpush2.bf16.msra.mxu0 %v286
    %382 = vmatprep.subr.bf16.mxu0 %v285
    %383 = vmatpush2.bf16.msra.mxu0 %v284
    %384 = vmatprep.subr.bf16.mxu0 %v283
    %385 = vmatpush2.bf16.msra.mxu0 %v282
    %386 = vmatprep.subr.bf16.mxu0 %v281
    %387 = vmatpush2.bf16.msra.mxu0 %v280
    %388 = vmatprep.subr.bf16.mxu0 %v279
    %389 = vmatpush2.bf16.msra.mxu0 %v278
    %390 = vmatprep.mubr.bf16.mxu0 %v113
    %391 = vmatmul.mubr.bf16.gmra.mxu0 %v106
    %v392 = vpop.f32.mrf.mxu0
    %v393 = vadd.f32 %v84, %v392
    %v394 = vpop.f32.mrf.mxu0
    %v395 = vadd.f32 %v88, %v394
    %v396 = vpop.f32.mrf.mxu0
    %v397 = vpop.f32.mrf.mxu0
    %398 = vdwg.mxu0
    %399 = vmatprep.subr.bf16.mxu0 %v309
    %400 = vmatpush1.bf16.msra.mxu0 %v308
    %401 = vmatprep.subr.bf16.mxu0 %v307
    %402 = vmatpush1.bf16.msra.mxu0 %v306
    %403 = vmatprep.subr.bf16.mxu0 %v305
    %404 = vmatpush1.bf16.msra.mxu0 %v304
    %405 = vmatprep.subr.bf16.mxu0 %v303
    %406 = vmatpush1.bf16.msra.mxu0 %v302
    %407 = vmatprep.subr.bf16.mxu0 %v301
    %408 = vmatpush1.bf16.msra.mxu0 %v300
    %409 = vmatprep.subr.bf16.mxu0 %v299
    %410 = vmatpush1.bf16.msra.mxu0 %v298
    %411 = vmatprep.subr.bf16.mxu0 %v297
    %412 = vmatpush1.bf16.msra.mxu0 %v296
    %413 = vmatprep.subr.bf16.mxu0 %v295
    %414 = vmatpush1.bf16.msra.mxu0 %v294
    %415 = vmatprep.subr.bf16.mxu0 0
    %416 = vmatpush2.bf16.msra.mxu0 0
    %417 = vmatprep.subr.bf16.mxu0 0
    %418 = vmatpush2.bf16.msra.mxu0 0
    %419 = vmatprep.subr.bf16.mxu0 0
    %420 = vmatpush2.bf16.msra.mxu0 0
    %421 = vmatprep.subr.bf16.mxu0 0
    %422 = vmatpush2.bf16.msra.mxu0 0
    %423 = vmatprep.subr.bf16.mxu0 0
    %424 = vmatpush2.bf16.msra.mxu0 0
    %425 = vmatprep.subr.bf16.mxu0 0
    %426 = vmatpush2.bf16.msra.mxu0 0
    %427 = vmatprep.subr.bf16.mxu0 0
    %428 = vmatpush2.bf16.msra.mxu0 0
    %429 = vmatprep.subr.bf16.mxu0 0
    %430 = vmatpush2.bf16.msra.mxu0 0
    %431 = vmatprep.mubr.bf16.mxu0 0
    %432 = vmatmul.mubr.bf16.gmra.mxu0 %v114
    %v433 = vpop.f32.mrf.mxu0
    %v434 = vadd.f32 %v393, %v433
    %v435 = vpop.f32.mrf.mxu0
    %v436 = vadd.f32 %v395, %v435
    %v437 = vpop.f32.mrf.mxu0
    %v438 = vpop.f32.mrf.mxu0
    %439 = vdwg.mxu0
    %v440 = vmax.f32 %v434, 0.0
    %v441 = vmax.f32 %v436, 0.0
    %v442 = vpack.c.bf16 %v440, %v440
    %v443 = vpack.c.bf16 %v441, %v441
    %v444 = vld [vmem:[#allocation2 + $0x180] sm:$0xff]
    %v445 = vld [vmem:[#allocation2 + $0x188] sm:$0xff]
    %v446 = vld [vmem:[#allocation2 + $0x190] sm:$0xff]
    %v447 = vld [vmem:[#allocation2 + $0x198] sm:$0xff]
    %v448 = vld [vmem:[#allocation2 + $0x1a0] sm:$0xff]
    %v449 = vld [vmem:[#allocation2 + $0x1a8] sm:$0xff]
    %v450 = vld [vmem:[#allocation2 + $0x1b0] sm:$0xff]
    %v451 = vld [vmem:[#allocation2 + $0x1b8] sm:$0xff]
    %v452 = vld [vmem:[#allocation2 + $0x1c0] sm:$0xff]
    %v453 = vld [vmem:[#allocation2 + $0x1c8] sm:$0xff]
    %v454 = vld [vmem:[#allocation2 + $0x1d0] sm:$0xff]
    %v455 = vld [vmem:[#allocation2 + $0x1d8] sm:$0xff]
    %v456 = vld [vmem:[#allocation2 + $0x1e0] sm:$0xff]
    %v457 = vld [vmem:[#allocation2 + $0x1e8] sm:$0xff]
    %v458 = vld [vmem:[#allocation2 + $0x1f0] sm:$0xff]
    %v459 = vld [vmem:[#allocation2 + $0x1f8] sm:$0xff]
    %v460 = vld [vmem:[#allocation2 + $0x200] sm:$0xff]
    %v461 = vld [vmem:[#allocation2 + $0x208] sm:$0xff]
    %v462 = vld [vmem:[#allocation2 + $0x210] sm:$0xff]
    %v463 = vld [vmem:[#allocation2 + $0x218] sm:$0xff]
    %v464 = vld [vmem:[#allocation2 + $0x220] sm:$0xff]
    %v465 = vld [vmem:[#allocation2 + $0x228] sm:$0xff]
    %v466 = vld [vmem:[#allocation2 + $0x230] sm:$0xff]
    %v467 = vld [vmem:[#allocation2 + $0x238] sm:$0xff]
    %v468 = vld [vmem:[#allocation2 + $0x240] sm:$0xff]
    %v469 = vld [vmem:[#allocation2 + $0x248] sm:$0xff]
    %v470 = vld [vmem:[#allocation2 + $0x250] sm:$0xff]
    %v471 = vld [vmem:[#allocation2 + $0x258] sm:$0xff]
    %v472 = vld [vmem:[#allocation2 + $0x260] sm:$0xff]
    %v473 = vld [vmem:[#allocation2 + $0x268] sm:$0xff]
    %v474 = vld [vmem:[#allocation2 + $0x270] sm:$0xff]
    %v475 = vld [vmem:[#allocation2 + $0x278] sm:$0xff]
    %s476 = scalar_lea.vmem %s2, 1
    %v477 = vld [vmem:[%s476] ss:$4 sm:$0x3]
    %v479 = vlaneseq
    %v480 = vshrl.u32 %v479, 7
    %v481 = vsub.s32 0, %v480
    %v482 = vrot.slane %v477, %v481
    %v483 = vlaneseq
    %v484 = vshrl.u32 %v483, 7
    %v485 = vsub.s32 1, %v484
    %v486 = vrot.slane %v477, %v485
    %v521 = vunpack.c.l.b16 %v444
    %v522 = vunpack.c.h.b16 %v444
    %v523 = vunpack.c.l.b16 %v445
    %v524 = vunpack.c.h.b16 %v445
    %v525 = vunpack.c.l.b16 %v446
    %v526 = vunpack.c.h.b16 %v446
    %v527 = vunpack.c.l.b16 %v447
    %v528 = vunpack.c.h.b16 %v447
    %v529 = vunpack.c.l.b16 %v448
    %v530 = vunpack.c.h.b16 %v448
    %v531 = vunpack.c.l.b16 %v449
    %v532 = vunpack.c.h.b16 %v449
    %v533 = vunpack.c.l.b16 %v450
    %v534 = vunpack.c.h.b16 %v450
    %v535 = vunpack.c.l.b16 %v451
    %v536 = vunpack.c.h.b16 %v451
    %v537 = vunpack.c.l.b16 %v452
    %v538 = vunpack.c.h.b16 %v452
    %v539 = vunpack.c.l.b16 %v453
    %v540 = vunpack.c.h.b16 %v453
    %v541 = vunpack.c.l.b16 %v454
    %v542 = vunpack.c.h.b16 %v454
    %v543 = vunpack.c.l.b16 %v455
    %v544 = vunpack.c.h.b16 %v455
    %v545 = vunpack.c.l.b16 %v456
    %v546 = vunpack.c.h.b16 %v456
    %v547 = vunpack.c.l.b16 %v457
    %v548 = vunpack.c.h.b16 %v457
    %v549 = vunpack.c.l.b16 %v458
    %v550 = vunpack.c.h.b16 %v458
    %v551 = vunpack.c.l.b16 %v459
    %v552 = vunpack.c.h.b16 %v459
    %v553 = vunpack.c.l.b16 %v460
    %v554 = vunpack.c.h.b16 %v460
    %v555 = vunpack.c.l.b16 %v461
    %v556 = vunpack.c.h.b16 %v461
    %v557 = vunpack.c.l.b16 %v462
    %v558 = vunpack.c.h.b16 %v462
    %v559 = vunpack.c.l.b16 %v463
    %v560 = vunpack.c.h.b16 %v463
    %v561 = vunpack.c.l.b16 %v464
    %v562 = vunpack.c.h.b16 %v464
    %v563 = vunpack.c.l.b16 %v465
    %v564 = vunpack.c.h.b16 %v465
    %v565 = vunpack.c.l.b16 %v466
    %v566 = vunpack.c.h.b16 %v466
    %v567 = vunpack.c.l.b16 %v467
    %v568 = vunpack.c.h.b16 %v467
    %v569 = vunpack.c.l.b16 %v468
    %v570 = vunpack.c.h.b16 %v468
    %v571 = vunpack.c.l.b16 %v469
    %v572 = vunpack.c.h.b16 %v469
    %v573 = vunpack.c.l.b16 %v470
    %v574 = vunpack.c.h.b16 %v470
    %v575 = vunpack.c.l.b16 %v471
    %v576 = vunpack.c.h.b16 %v471
    %v577 = vunpack.c.l.b16 %v472
    %v578 = vunpack.c.h.b16 %v472
    %v579 = vunpack.c.l.b16 %v473
    %v580 = vunpack.c.h.b16 %v473
    %v581 = vunpack.c.l.b16 %v474
    %v582 = vunpack.c.h.b16 %v474
    %v583 = vunpack.c.l.b16 %v475
    %v584 = vunpack.c.h.b16 %v475
    %v585 = vpack.c.b16 %v523, %v521
    %v586 = vpack.c.b16 %v524, %v522
    %v587 = vpack.c.b16 %v527, %v525
    %v588 = vpack.c.b16 %v528, %v526
    %v589 = vpack.c.b16 %v531, %v529
    %v590 = vpack.c.b16 %v532, %v530
    %v591 = vpack.c.b16 %v535, %v533
    %v592 = vpack.c.b16 %v536, %v534
    %v593 = vpack.c.b16 %v539, %v537
    %v594 = vpack.c.b16 %v540, %v538
    %v595 = vpack.c.b16 %v543, %v541
    %v596 = vpack.c.b16 %v544, %v542
    %v597 = vpack.c.b16 %v547, %v545
    %v598 = vpack.c.b16 %v548, %v546
    %v599 = vpack.c.b16 %v551, %v549
    %v600 = vpack.c.b16 %v552, %v550
    %v601 = vpack.c.b16 %v555, %v553
    %v602 = vpack.c.b16 %v556, %v554
    %v603 = vpack.c.b16 %v559, %v557
    %v604 = vpack.c.b16 %v560, %v558
    %v605 = vpack.c.b16 %v563, %v561
    %v606 = vpack.c.b16 %v564, %v562
    %v607 = vpack.c.b16 %v567, %v565
    %v608 = vpack.c.b16 %v568, %v566
    %v609 = vpack.c.b16 %v571, %v569
    %v610 = vpack.c.b16 %v572, %v570
    %v611 = vpack.c.b16 %v575, %v573
    %v612 = vpack.c.b16 %v576, %v574
    %v613 = vpack.c.b16 %v579, %v577
    %v614 = vpack.c.b16 %v580, %v578
    %v615 = vpack.c.b16 %v583, %v581
    %v616 = vpack.c.b16 %v584, %v582
    %649 = vmatprep.subr.bf16.mxu0 %v600
    %650 = vmatpush1.bf16.msra.mxu0 %v599
    %651 = vmatprep.subr.bf16.mxu0 %v598
    %652 = vmatpush1.bf16.msra.mxu0 %v597
    %653 = vmatprep.subr.bf16.mxu0 %v596
    %654 = vmatpush1.bf16.msra.mxu0 %v595
    %655 = vmatprep.subr.bf16.mxu0 %v594
    %656 = vmatpush1.bf16.msra.mxu0 %v593
    %657 = vmatprep.subr.bf16.mxu0 %v592
    %658 = vmatpush1.bf16.msra.mxu0 %v591
    %659 = vmatprep.subr.bf16.mxu0 %v590
    %660 = vmatpush1.bf16.msra.mxu0 %v589
    %661 = vmatprep.subr.bf16.mxu0 %v588
    %662 = vmatpush1.bf16.msra.mxu0 %v587
    %663 = vmatprep.subr.bf16.mxu0 %v586
    %664 = vmatpush1.bf16.msra.mxu0 %v585
    %665 = vmatprep.subr.bf16.mxu0 %v616
    %666 = vmatpush2.bf16.msra.mxu0 %v615
    %667 = vmatprep.subr.bf16.mxu0 %v614
    %668 = vmatpush2.bf16.msra.mxu0 %v613
    %669 = vmatprep.subr.bf16.mxu0 %v612
    %670 = vmatpush2.bf16.msra.mxu0 %v611
    %671 = vmatprep.subr.bf16.mxu0 %v610
    %672 = vmatpush2.bf16.msra.mxu0 %v609
    %673 = vmatprep.subr.bf16.mxu0 %v608
    %674 = vmatpush2.bf16.msra.mxu0 %v607
    %675 = vmatprep.subr.bf16.mxu0 %v606
    %676 = vmatpush2.bf16.msra.mxu0 %v605
    %677 = vmatprep.subr.bf16.mxu0 %v604
    %678 = vmatpush2.bf16.msra.mxu0 %v603
    %679 = vmatprep.subr.bf16.mxu0 %v602
    %680 = vmatpush2.bf16.msra.mxu0 %v601
    %681 = vmatprep.mubr.bf16.mxu0 %v443
    %682 = vmatmul.mubr.bf16.gmra.mxu0 %v442
    %v683 = vpop.f32.mrf.mxu0
    %v684 = vadd.f32 %v482, %v683
    %v685 = vpop.f32.mrf.mxu0
    %v686 = vadd.f32 %v486, %v685
    %v687 = vpop.f32.mrf.mxu0
    %v688 = vpop.f32.mrf.mxu0
    %689 = vdwg.mxu0
    %v690 = vmax.f32 %v684, 0.0
    %v691 = vmax.f32 %v686, 0.0
    %v692 = vpack.c.bf16 %v690, %v690
    %v693 = vpack.c.bf16 %v691, %v691
    %v694 = vld [vmem:[#allocation2 + $0x280] sm:$0xf]
    %v695 = vld [vmem:[#allocation2 + $0x288] sm:$0xf]
    %v696 = vld [vmem:[#allocation2 + $0x290] sm:$0xf]
    %v697 = vld [vmem:[#allocation2 + $0x298] sm:$0xf]
    %v698 = vld [vmem:[#allocation2 + $0x2a0] sm:$0xf]
    %v699 = vld [vmem:[#allocation2 + $0x2a8] sm:$0xf]
    %v700 = vld [vmem:[#allocation2 + $0x2b0] sm:$0xf]
    %v701 = vld [vmem:[#allocation2 + $0x2b8] sm:$0xf]
    %v702 = vld [vmem:[#allocation2 + $0x2c0] sm:$0xf]
    %v703 = vld [vmem:[#allocation2 + $0x2c8] sm:$0xf]
    %v704 = vld [vmem:[#allocation2 + $0x2d0] sm:$0xf]
    %v705 = vld [vmem:[#allocation2 + $0x2d8] sm:$0xf]
    %v706 = vld [vmem:[#allocation2 + $0x2e0] sm:$0xf]
    %v707 = vld [vmem:[#allocation2 + $0x2e8] sm:$0xf]
    %v708 = vld [vmem:[#allocation2 + $0x2f0] sm:$0xf]
    %v709 = vld [vmem:[#allocation2 + $0x2f8] sm:$0xf]
    %v710 = vld [vmem:[#allocation2 + $0x300] sm:$0xf]
    %v711 = vld [vmem:[#allocation2 + $0x308] sm:$0xf]
    %v712 = vld [vmem:[#allocation2 + $0x310] sm:$0xf]
    %v713 = vld [vmem:[#allocation2 + $0x318] sm:$0xf]
    %v714 = vld [vmem:[#allocation2 + $0x320] sm:$0xf]
    %v715 = vld [vmem:[#allocation2 + $0x328] sm:$0xf]
    %v716 = vld [vmem:[#allocation2 + $0x330] sm:$0xf]
    %v717 = vld [vmem:[#allocation2 + $0x338] sm:$0xf]
    %v718 = vld [vmem:[#allocation2 + $0x340] sm:$0xf]
    %v719 = vld [vmem:[#allocation2 + $0x348] sm:$0xf]
    %v720 = vld [vmem:[#allocation2 + $0x350] sm:$0xf]
    %v721 = vld [vmem:[#allocation2 + $0x358] sm:$0xf]
    %v722 = vld [vmem:[#allocation2 + $0x360] sm:$0xf]
    %v723 = vld [vmem:[#allocation2 + $0x368] sm:$0xf]
    %v724 = vld [vmem:[#allocation2 + $0x370] sm:$0xf]
    %v725 = vld [vmem:[#allocation2 + $0x378] sm:$0xf]
    %v726 = vld [vmem:[%s2 + $0x2] sm:$0x1]
    %v727 = vlaneseq
    %v728 = vshrl.u32 %v727, 7
    %v729 = vsub.s32 0, %v728
    %v730 = vrot.slane %v726, %v729
    %v763 = vunpack.c.l.b16 %v694
    %v764 = vunpack.c.l.b16 %v695
    %v765 = vunpack.c.l.b16 %v696
    %v766 = vunpack.c.l.b16 %v697
    %v767 = vunpack.c.l.b16 %v698
    %v768 = vunpack.c.l.b16 %v699
    %v769 = vunpack.c.l.b16 %v700
    %v770 = vunpack.c.l.b16 %v701
    %v771 = vunpack.c.l.b16 %v702
    %v772 = vunpack.c.l.b16 %v703
    %v773 = vunpack.c.l.b16 %v704
    %v774 = vunpack.c.l.b16 %v705
    %v775 = vunpack.c.l.b16 %v706
    %v776 = vunpack.c.l.b16 %v707
    %v777 = vunpack.c.l.b16 %v708
    %v778 = vunpack.c.l.b16 %v709
    %v779 = vunpack.c.l.b16 %v710
    %v780 = vunpack.c.l.b16 %v711
    %v781 = vunpack.c.l.b16 %v712
    %v782 = vunpack.c.l.b16 %v713
    %v783 = vunpack.c.l.b16 %v714
    %v784 = vunpack.c.l.b16 %v715
    %v785 = vunpack.c.l.b16 %v716
    %v786 = vunpack.c.l.b16 %v717
    %v787 = vunpack.c.l.b16 %v718
    %v788 = vunpack.c.l.b16 %v719
    %v789 = vunpack.c.l.b16 %v720
    %v790 = vunpack.c.l.b16 %v721
    %v791 = vunpack.c.l.b16 %v722
    %v792 = vunpack.c.l.b16 %v723
    %v793 = vunpack.c.l.b16 %v724
    %v794 = vunpack.c.l.b16 %v725
    %v795 = vpack.c.b16 %v764, %v763
    %v796 = vpack.c.b16 %v766, %v765
    %v797 = vpack.c.b16 %v768, %v767
    %v798 = vpack.c.b16 %v770, %v769
    %v799 = vpack.c.b16 %v772, %v771
    %v800 = vpack.c.b16 %v774, %v773
    %v801 = vpack.c.b16 %v776, %v775
    %v802 = vpack.c.b16 %v778, %v777
    %v803 = vpack.c.b16 %v780, %v779
    %v804 = vpack.c.b16 %v782, %v781
    %v805 = vpack.c.b16 %v784, %v783
    %v806 = vpack.c.b16 %v786, %v785
    %v807 = vpack.c.b16 %v788, %v787
    %v808 = vpack.c.b16 %v790, %v789
    %v809 = vpack.c.b16 %v792, %v791
    %v810 = vpack.c.b16 %v794, %v793
    %827 = vmatprep.subr.bf16.mxu0 0
    %828 = vmatpush1.bf16.msra.mxu0 %v802
    %829 = vmatprep.subr.bf16.mxu0 0
    %830 = vmatpush1.bf16.msra.mxu0 %v801
    %831 = vmatprep.subr.bf16.mxu0 0
    %832 = vmatpush1.bf16.msra.mxu0 %v800
    %833 = vmatprep.subr.bf16.mxu0 0
    %834 = vmatpush1.bf16.msra.mxu0 %v799
    %835 = vmatprep.subr.bf16.mxu0 0
    %836 = vmatpush1.bf16.msra.mxu0 %v798
    %837 = vmatprep.subr.bf16.mxu0 0
    %838 = vmatpush1.bf16.msra.mxu0 %v797
    %839 = vmatprep.subr.bf16.mxu0 0
    %840 = vmatpush1.bf16.msra.mxu0 %v796
    %841 = vmatprep.subr.bf16.mxu0 0
    %842 = vmatpush1.bf16.msra.mxu0 %v795
    %843 = vmatprep.subr.bf16.mxu0 0
    %844 = vmatpush2.bf16.msra.mxu0 %v810
    %845 = vmatprep.subr.bf16.mxu0 0
    %846 = vmatpush2.bf16.msra.mxu0 %v809
    %847 = vmatprep.subr.bf16.mxu0 0
    %848 = vmatpush2.bf16.msra.mxu0 %v808
    %849 = vmatprep.subr.bf16.mxu0 0
    %850 = vmatpush2.bf16.msra.mxu0 %v807
    %851 = vmatprep.subr.bf16.mxu0 0
    %852 = vmatpush2.bf16.msra.mxu0 %v806
    %853 = vmatprep.subr.bf16.mxu0 0
    %854 = vmatpush2.bf16.msra.mxu0 %v805
    %855 = vmatprep.subr.bf16.mxu0 0
    %856 = vmatpush2.bf16.msra.mxu0 %v804
    %857 = vmatprep.subr.bf16.mxu0 0
    %858 = vmatpush2.bf16.msra.mxu0 %v803
    %859 = vmatprep.mubr.bf16.mxu0 %v693
    %860 = vmatmul.mubr.bf16.gmra.mxu0 %v692
    %v861 = vpop.f32.mrf.mxu0
    %v862 = vadd.f32 %v730, %v861
    %v863 = vpop.f32.mrf.mxu0
    %v864 = vpop.f32.mrf.mxu0
    %v865 = vpop.f32.mrf.mxu0
    %866 = vdwg.mxu0
    %867 = vst [vmem:[#allocation5] sm:$0x3] %v862
    // Predicated region
    $region18: #{dqn_forward.1} parent=1 // pred_check
      _
    $region19: #{dqn_forward.1} parent=1 // pred_check_branch
      %869 = sbr.rel (0) target = $region21
    $region20: #{dqn_forward.1} parent=1 // pred_region
      %s871 = ssub.s32 32, 32
      %872 = vsyncadd [#allocation4], %s871
      %s874 = sshll.u32 [#allocation5], 4
      %s875 = int_to_ptr.vmem [resolvable:$true] %s874
      %877 = dma.vmem_to_hbm [thread:$0]  %s875, 32, %s3, [#allocation4]
    $region21: #{dqn_forward.1} parent=1 // pred_fallthru
      _
    // Predicated region
    $region22: #{dqn_forward.1} parent=1 // pred_check
      _
    $region23: #{dqn_forward.1} parent=1 // pred_check_branch
      %879 = sbr.rel (0) target = $region25
    $region24: #{dqn_forward.1} parent=1 // pred_region
      %880 = dma.done [#allocation4], 32
    $region25: #{dqn_forward.1} parent=1 // pred_fallthru
      _
    %881 = vsyncpa [#allocation3], 1
    %882 = vsyncpa [#allocation4], 1

</llo_original>
